<compile_context>
chip_gen: v7x
topology: tpu7x:2x2x1
jax: 0.10.0
libtpu: 0.0.40
codegen_flags: <defaults>
</compile_context>

<pallas_src>
import jax
import jax.numpy as jnp
from jax.experimental import pallas as pl
from jax.experimental.pallas import tpu as pltpu


def _round_up(x, m):
    return ((x + m - 1) // m) * m


def _cdiv(a, b):
    return -(-a // b)


def _vmem_capacity_bytes():
    """Per-core VMEM capacity; conservative v7x fallback (64 MiB) if the query fails."""
    try:
        return int(pltpu.get_tpu_info().vmem_capacity_bytes)
    except Exception:
        return 64 * 2**20


def _make_mlp_kernel(compute_dtype):
    def _mlp_kernel(x_ref, w1_ref, b1_ref, w2_ref, b2_ref, o_ref):
        # x_ref:(TM,D)  w1_ref:(D,Hp)  b1_ref:(1,Hp)  w2_ref:(Hp,D)  b2_ref:(1,D)  o_ref:(TM,D)
        x = x_ref[...]
        if compute_dtype is not None and x.dtype != compute_dtype:
            x = x.astype(compute_dtype)
        h = jnp.dot(x, w1_ref[...], preferred_element_type=jnp.float32)
        h = jnp.maximum(h + b1_ref[...].astype(jnp.float32), 0.0)          # bias + ReLU (f32)
        y = jnp.dot(h.astype(w2_ref.dtype), w2_ref[...],
                    preferred_element_type=jnp.float32)
        o_ref[...] = (y + b2_ref[...].astype(jnp.float32)).astype(o_ref.dtype)
    return _mlp_kernel


def _per_row_bytes(D, H_pad, x_itemsize, w_itemsize):
    # x + out row tiles (double-buffered) + f32 h + f32 y + h cast back for the 2nd dot.
    return (2 * 2 * D * x_itemsize
            + H_pad * 4 + D * 4
            + H_pad * w_itemsize)


def _choose_tile_m(M, D, H_pad, x_itemsize, w_itemsize, sublane, vmem_budget, weight_bytes):
    """Largest row tile whose streaming buffers + f32 temporaries fit the VMEM budget."""
    per_row = _per_row_bytes(D, H_pad, x_itemsize, w_itemsize)
    cap = max(sublane, (vmem_budget - weight_bytes) // per_row)
    candidates = [t for t in (1024, 768, 512, 384, 256, 128, 64, 32, 16, 8)
                  if sublane <= t <= cap]
    if not candidates:
        candidates = [sublane]
    # Don't pick a tile wildly larger than M itself (avoid pure padding work).
    m_ceil = _round_up(max(M, sublane), sublane)
    tile = next((t for t in candidates if t <= m_ceil), candidates[-1])
    # Keep >= 2 grid steps whenever M allows it so a 2-TensorCore part (v7x) can shard
    # the "parallel" axis; near-free since weights are resident and shared.
    if _cdiv(M, tile) < 2 and M >= 2 * sublane:
        tile = min(tile, max(sublane, _round_up(_cdiv(M, 2), sublane)))
    return tile


def prepare_mlp_params(w1, b1, w2, b2, *, pad_hidden=True, compute_dtype=None):
    """One-time parameter prep: pad hidden dim to a lane-dense multiple of 128 (exact
    no-op mathematically) and optionally cast weights to the MXU compute dtype.
    Call this once at setup so the per-forward hot path carries no weight-sized copies."""
    D, H = w1.shape
    assert w2.shape == (H, D) and b1.shape[-1] == H and b2.shape[-1] == D
    H_pad = _round_up(H, 128) if pad_hidden else H
    if H_pad != H:
        w1 = jnp.pad(w1, ((0, 0), (0, H_pad - H)))
        b1 = jnp.pad(b1.reshape(-1), ((0, H_pad - H),))
        w2 = jnp.pad(w2, ((0, H_pad - H), (0, 0)))
    if compute_dtype is not None:
        compute_dtype = jnp.dtype(compute_dtype)
        w1 = w1.astype(compute_dtype)
        w2 = w2.astype(compute_dtype)
    return w1, b1.reshape(1, H_pad), w2, b2.reshape(1, D)


def mlp_pallas(x_nchw, w1, b1, w2, b2, *, tile_m=None, pad_hidden=True, compute_dtype=None):
    """x_nchw: (b, ch, h, w). w1: (D, H[_pad]), b1: (H[_pad],), w2: (H[_pad], D), b2: (D,),
    D = h*w. Pass params through prepare_mlp_params() once to keep the hot path clean."""
    b, ch, h, w = x_nchw.shape
    D = h * w
    M = b * ch
    assert w1.shape[0] == D and w2.shape[1] == D

    # Fallback per-call pad only if the caller did not pre-prepare (H not lane-dense).
    H = w1.shape[1]
    if pad_hidden and H % 128 != 0:
        w1, b1, w2, b2 = prepare_mlp_params(w1, b1, w2, b2,
                                            pad_hidden=True, compute_dtype=compute_dtype)
    elif compute_dtype is not None and w1.dtype != jnp.dtype(compute_dtype):
        w1 = w1.astype(compute_dtype)
        w2 = w2.astype(compute_dtype)
    H_pad = w1.shape[1]
    b1_2d = b1.reshape(1, H_pad)
    b2_2d = b2.reshape(1, D)

    x_itemsize = jnp.dtype(x_nchw.dtype).itemsize
    w_itemsize = jnp.dtype(w1.dtype).itemsize
    sublane = 16 if x_itemsize == 2 else 8          # bf16 packs 2 rows/sublane

    # Generation-aware VMEM budget (v7x: 64 MiB/TC, v5e/v6e: 128 MiB) with headroom.
    vmem_cap = _vmem_capacity_bytes()
    vmem_budget = int(0.75 * vmem_cap)

    weight_bytes = 2 * D * H_pad * w_itemsize + (H_pad + D) * jnp.dtype(b1_2d.dtype).itemsize
    per_row = _per_row_bytes(D, H_pad, x_itemsize, w_itemsize)
    # TODO(synk): K-tiled (hidden-dim "arbitrary" axis + f32 accumulator) fallback for
    # weights that don't fit VMEM; at these sizes residency is the right call.
    if weight_bytes + sublane * per_row > vmem_budget:
        raise ValueError(
            f"MLP weights ({weight_bytes} B) + minimal row tile exceed the VMEM budget "
            f"({vmem_budget} B); hidden-dim tiling is not implemented.")

    if tile_m is None:
        tile_m = _choose_tile_m(M, D, H_pad, x_itemsize, w_itemsize,
                                sublane, vmem_budget, weight_bytes)
    tile_m = max(sublane, _round_up(int(tile_m), sublane))

    # No row padding / output slicing: the last block overhangs (reads padded, writes masked).
    grid = (_cdiv(M, tile_m),)
    x2d = x_nchw.reshape(M, D)                      # free view of contiguous NCHW

    # VMEM limit sized from actual need (weights + streamed tiles + f32 temps), capped
    # at 90% of physical capacity so the compiler keeps internal-scratch headroom.
    stream_bytes = 2 * 2 * tile_m * D * x_itemsize
    temp_bytes = tile_m * (H_pad * 4 + D * 4 + H_pad * w_itemsize)
    need = weight_bytes + stream_bytes + temp_bytes
    vmem_limit = int(min(0.9 * vmem_cap, max(32 * 2**20, 1.5 * need)))

    m_eff = grid[0] * tile_m
    cost = pl.CostEstimate(
        flops=4 * m_eff * D * H_pad,                                     # two matmuls
        transcendentals=0,
        bytes_accessed=2 * M * D * x_itemsize + weight_bytes,
    )

    out2d = pl.pallas_call(
        _make_mlp_kernel(compute_dtype),
        out_shape=jax.ShapeDtypeStruct((M, D), x_nchw.dtype),
        grid_spec=pltpu.PrefetchScalarGridSpec(
            num_scalar_prefetch=0,
            grid=grid,
            in_specs=[
                pl.BlockSpec((tile_m, D), lambda i: (i, 0)),             # X row tile (streamed)
                pl.BlockSpec((D, H_pad), lambda i: (0, 0),
                             pipeline_mode=pl.Buffered(1)),              # W1 (resident)
                pl.BlockSpec((1, H_pad), lambda i: (0, 0),
                             pipeline_mode=pl.Buffered(1)),              # b1
                pl.BlockSpec((H_pad, D), lambda i: (0, 0),
                             pipeline_mode=pl.Buffered(1)),              # W2 (resident)
                pl.BlockSpec((1, D), lambda i: (0, 0),
                             pipeline_mode=pl.Buffered(1)),              # b2
            ],
            out_specs=pl.BlockSpec((tile_m, D), lambda i: (i, 0)),       # Y row tile (streamed)
        ),
        compiler_params=pltpu.CompilerParams(
            dimension_semantics=("parallel",),
            vmem_limit_bytes=vmem_limit,
        ),
        cost_estimate=cost,
    )(x2d, w1, b1_2d, w2, b2_2d)

    return out2d.reshape(b, ch, h, w)


def mlp_ref(x_nchw, w1, b1, w2, b2):
    b, ch, h, w = x_nchw.shape
    x2d = x_nchw.reshape(b * ch, h * w)
    h_act = jnp.maximum(x2d @ w1 + b1, 0.0)
    y = h_act @ w2 + b2
    return y.reshape(b, ch, h, w)


if __name__ == "__main__":
    # Shapes implied by the forward: input_dim == h*w.
    B, CH, Hs, Ws = 2, 4, 16, 16
    INPUT_DIM = Hs * Ws          # 256
    HIDDEN_DIM = 32

    key = jax.random.PRNGKey(0)
    kx, k1, k2, k3, k4 = jax.random.split(key, 5)

    x = jax.random.normal(kx, (B, CH, Hs, Ws), dtype=jnp.float32)

    # Deterministic nn.Linear-style init (uniform +- 1/sqrt(fan_in)).
    lim1 = 1.0 / jnp.sqrt(jnp.float32(INPUT_DIM))
    lim2 = 1.0 / jnp.sqrt(jnp.float32(HIDDEN_DIM))
    # Stored as (in_dim, out_dim), i.e. transposed relative to torch's (out, in).
    w1 = jax.random.uniform(k1, (INPUT_DIM, HIDDEN_DIM), jnp.float32, -lim1, lim1)
    b1 = jax.random.uniform(k2, (HIDDEN_DIM,), jnp.float32, -lim1, lim1)
    w2 = jax.random.uniform(k3, (HIDDEN_DIM, INPUT_DIM), jnp.float32, -lim2, lim2)
    b2 = jax.random.uniform(k4, (INPUT_DIM,), jnp.float32, -lim2, lim2)

    # One-time parameter prep (hidden-dim pad to 128) outside the per-call hot path.
    w1p, b1p, w2p, b2p = prepare_mlp_params(w1, b1, w2, b2)

    out = mlp_pallas(x, w1p, b1p, w2p, b2p)
    out = jax.block_until_ready(out)

    ref = mlp_ref(x, w1, b1, w2, b2)
    assert out.shape == (B, CH, Hs, Ws)
    assert jnp.allclose(out, ref, atol=1e-5, rtol=1e-5), "mismatch vs reference"

    print("KERNEL_OK")
</pallas_src>

<mosaic_0001>
module attributes {stable_mosaic.version = 11 : i64} {
  func.func @_mlp_kernel(%arg0: i32, %arg1: memref<8x256xf32, #tpu.memory_space<vmem>>, %arg2: memref<256x128xf32, #tpu.memory_space<vmem>>, %arg3: memref<1x128xf32, #tpu.memory_space<vmem>>, %arg4: memref<128x256xf32, #tpu.memory_space<vmem>>, %arg5: memref<1x256xf32, #tpu.memory_space<vmem>>, %arg6: memref<8x256xf32, #tpu.memory_space<vmem>>) attributes {dimension_semantics = [#tpu.dimension_semantics<parallel>], iteration_bounds = array<i64: 1>, scalar_prefetch = 0 : i64, scratch_operands = 0 : i64, tpu.core_type = #tpu.core_type<tc>, window_params = [{transform_indices = @transform_0, window_bounds = array<i64: 8, 256>}, {pipeline_mode = #tpu.pipeline_mode<synchronous>, transform_indices = @transform_1, window_bounds = array<i64: 256, 128>}, {pipeline_mode = #tpu.pipeline_mode<synchronous>, transform_indices = @transform_2, window_bounds = array<i64: 1, 128>}, {pipeline_mode = #tpu.pipeline_mode<synchronous>, transform_indices = @transform_3, window_bounds = array<i64: 128, 256>}, {pipeline_mode = #tpu.pipeline_mode<synchronous>, transform_indices = @transform_4, window_bounds = array<i64: 1, 256>}, {transform_indices = @transform_5, window_bounds = array<i64: 8, 256>}]} {
    %c0 = arith.constant 0 : index
    %c0_0 = arith.constant 0 : index
    %0 = vector.load %arg1[%c0, %c0_0] : memref<8x256xf32, #tpu.memory_space<vmem>>, vector<8x256xf32>
    %c0_1 = arith.constant 0 : index
    %c0_2 = arith.constant 0 : index
    %1 = vector.load %arg2[%c0_1, %c0_2] : memref<256x128xf32, #tpu.memory_space<vmem>>, vector<256x128xf32>
    %cst = arith.constant dense<0.000000e+00> : vector<8x128xf32>
    %2 = tpu.matmul %0, %1, %cst {dimension_numbers = #tpu.dot_dimension_numbers<[1], [0], [0], [1], [0, 0, 1, 1], [], []>} : vector<8x256xf32>, vector<256x128xf32>, vector<8x128xf32> -> vector<8x128xf32>
    %c0_3 = arith.constant 0 : index
    %c0_4 = arith.constant 0 : index
    %3 = vector.load %arg3[%c0_3, %c0_4] : memref<1x128xf32, #tpu.memory_space<vmem>>, vector<1x128xf32>
    %4 = vector.broadcast %3 : vector<1x128xf32> to vector<8x128xf32>
    %5 = arith.addf %2, %4 : vector<8x128xf32>
    %cst_5 = arith.constant 0.000000e+00 : f32
    %6 = vector.broadcast %cst_5 : f32 to vector<8x128xf32>
    %7 = arith.maximumf %5, %6 : vector<8x128xf32>
    %c0_6 = arith.constant 0 : index
    %c0_7 = arith.constant 0 : index
    %8 = vector.load %arg4[%c0_6, %c0_7] : memref<128x256xf32, #tpu.memory_space<vmem>>, vector<128x256xf32>
    %cst_8 = arith.constant dense<0.000000e+00> : vector<8x256xf32>
    %9 = tpu.matmul %7, %8, %cst_8 {dimension_numbers = #tpu.dot_dimension_numbers<[1], [0], [0], [1], [0, 0, 1, 1], [], []>} : vector<8x128xf32>, vector<128x256xf32>, vector<8x256xf32> -> vector<8x256xf32>
    %c0_9 = arith.constant 0 : index
    %c0_10 = arith.constant 0 : index
    %10 = vector.load %arg5[%c0_9, %c0_10] : memref<1x256xf32, #tpu.memory_space<vmem>>, vector<1x256xf32>
    %11 = vector.broadcast %10 : vector<1x256xf32> to vector<8x256xf32>
    %12 = arith.addf %9, %11 : vector<8x256xf32>
    %c0_11 = arith.constant 0 : index
    %c0_12 = arith.constant 0 : index
    %13 = vector.load %arg6[%c0_11, %c0_12] : memref<8x256xf32, #tpu.memory_space<vmem>>, vector<8x256xf32>
    tpu.vector_store %arg6[%c0_11, %c0_12], %12 {strides = array<i32>} : memref<8x256xf32, #tpu.memory_space<vmem>>, vector<8x256xf32>,
    return
  }
  func.func @transform_0(%arg0: i32) -> (i32, i32) {
    %c0_i32 = arith.constant 0 : i32
    %c0_i32_0 = arith.constant 0 : i32
    return %arg0, %c0_i32 : i32, i32
  }
  func.func @transform_1(%arg0: i32) -> (i32, i32) {
    %c0_i32 = arith.constant 0 : i32
    %c0_i32_0 = arith.constant 0 : i32
    %c0_i32_1 = arith.constant 0 : i32
    return %c0_i32, %c0_i32_0 : i32, i32
  }
  func.func @transform_2(%arg0: i32) -> (i32, i32) {
    %c0_i32 = arith.constant 0 : i32
    %c0_i32_0 = arith.constant 0 : i32
    %c0_i32_1 = arith.constant 0 : i32
    return %c0_i32, %c0_i32_0 : i32, i32
  }
  func.func @transform_3(%arg0: i32) -> (i32, i32) {
    %c0_i32 = arith.constant 0 : i32
    %c0_i32_0 = arith.constant 0 : i32
    %c0_i32_1 = arith.constant 0 : i32
    return %c0_i32, %c0_i32_0 : i32, i32
  }
  func.func @transform_4(%arg0: i32) -> (i32, i32) {
    %c0_i32 = arith.constant 0 : i32
    %c0_i32_0 = arith.constant 0 : i32
    %c0_i32_1 = arith.constant 0 : i32
    return %c0_i32, %c0_i32_0 : i32, i32
  }
  func.func @transform_5(%arg0: i32) -> (i32, i32) {
    %c0_i32 = arith.constant 0 : i32
    %c0_i32_0 = arith.constant 0 : i32
    return %arg0, %c0_i32 : i32, i32
  }
}

</mosaic_0001>

<llo_original>
// kernel: tpu_custom_call.1
$region0: #{tpu_custom_call.1}
  #allocation0 [shape = 'u32[]', space=smem, size = 0x4, offset = 0x4, fixed_abs, tag = 'smem constant byte address 0x4 - core index']
  #allocation1 [shape = 'u32[144,128]{1,0:T(1,128)}', space=vmem, size = 0x12000, scoped, tag = 'internal scratch']
  %s0 = inlined_call_operand.hbm [shape: f32[8,256], index: 0, kind: input, shape index: {}]
  %s1 = inlined_call_operand.hbm [shape: f32[256,128], index: 1, kind: input, shape index: {}]
  %s2 = inlined_call_operand.vmem [shape: f32[1,128], index: 2, kind: input, shape index: {}]
  %s3 = inlined_call_operand.hbm [shape: f32[128,256], index: 3, kind: input, shape index: {}]
  %s4 = inlined_call_operand.vmem [shape: f32[1,256], index: 4, kind: input, shape index: {}]
  %s5 = inlined_call_operand.hbm [shape: f32[8,256], index: 5, kind: output, shape index: {}]
  %s6 = sld [smem:[#allocation0]]
  $region42: #{tpu_custom_call.1} parent=0
    _
  %s8 = ssub.s32 1, %s6
  %s9 = scalar_select 0, %s8, %s6
  $region1: #{tpu_custom_call.1} parent=0
    #allocation2 [shape = 'u8[8192]{0}', space=vmem, size = 0x2000, scoped, tag = 'input window, operand 0, single buffered']
    #allocation3 [shape = 's32[1]{0}', space=sflag, size = 0x4, scoped, tag = 'scoped memory for tpu_custom_call.1']
    #allocation4 [shape = 's32[1]{0}', space=sflag, size = 0x4, scoped, tag = 'scoped memory for tpu_custom_call.1']
    #allocation5 [shape = 'u8[131072]{0}', space=vmem, size = 0x20000, scoped, tag = 'input window, operand 1, single buffered']
    #allocation6 [shape = 's32[1]{0}', space=sflag, size = 0x4, scoped, tag = 'scoped memory for tpu_custom_call.1']
    #allocation7 [shape = 'u8[131072]{0}', space=vmem, size = 0x20000, scoped, tag = 'input window, operand 3, single buffered']
    #allocation8 [shape = 'u8[8192]{0}', space=vmem, size = 0x2000, scoped, tag = 'output window, operand 0, single buffered']
    %10 = vsyncpa [#allocation3], 0
    %11 = vsyncpa [#allocation6], 0
    %12 = vsyncpa [#allocation4], 0
    // Predicated region
    $region2: #{tpu_custom_call.1} parent=1 // pred_check
      _
    $region3: #{tpu_custom_call.1} parent=1 // pred_check_branch
      %14 = sbr.rel (0) target = $region5
    $region4: #{tpu_custom_call.1} parent=1 // pred_region
      %s16 = ssub.s32 256, 256
      %17 = vsyncadd [#allocation3], %s16
      %s19 = sshll.u32 [#allocation2], 4
      %s20 = int_to_ptr.vmem [resolvable:$true] %s19
      %22 = dma.hbm_to_vmem [thread:$0]  %s0, 256, %s20, [#allocation3]
    $region5: #{tpu_custom_call.1} parent=1 // pred_fallthru
      _
    // Predicated region
    $region6: #{tpu_custom_call.1} parent=1 // pred_check
      _
    $region7: #{tpu_custom_call.1} parent=1 // pred_check_branch
      %24 = sbr.rel (0) target = $region9
    $region8: #{tpu_custom_call.1} parent=1 // pred_region
      %s26 = ssub.s32 4096, 4096
      %27 = vsyncadd [#allocation6], %s26
      %s28 = sshll.u32 [#allocation5], 4
      %s29 = int_to_ptr.vmem [resolvable:$true] %s28
      %34 = dma.hbm_to_vmem [thread:$0]  %s1, 4096, %s29, [#allocation6], 128, 128, 8
    $region9: #{tpu_custom_call.1} parent=1 // pred_fallthru
      _
    // Predicated region
    $region10: #{tpu_custom_call.1} parent=1 // pred_check
      _
    $region11: #{tpu_custom_call.1} parent=1 // pred_check_branch
      %36 = sbr.rel (0) target = $region13
    $region12: #{tpu_custom_call.1} parent=1 // pred_region
      _
    $region13: #{tpu_custom_call.1} parent=1 // pred_fallthru
      _
    // Predicated region
    $region14: #{tpu_custom_call.1} parent=1 // pred_check
      _
    $region15: #{tpu_custom_call.1} parent=1 // pred_check_branch
      %38 = sbr.rel (0) target = $region17
    $region16: #{tpu_custom_call.1} parent=1 // pred_region
      %s40 = ssub.s32 4096, 4096
      %41 = vsyncadd [#allocation6], %s40
      %s42 = sshll.u32 [#allocation7], 4
      %s43 = int_to_ptr.vmem [resolvable:$true] %s42
      %48 = dma.hbm_to_vmem [thread:$0]  %s3, 4096, %s43, [#allocation6], 256, 256, 16
    $region17: #{tpu_custom_call.1} parent=1 // pred_fallthru
      _
    // Predicated region
    $region18: #{tpu_custom_call.1} parent=1 // pred_check
      _
    $region19: #{tpu_custom_call.1} parent=1 // pred_check_branch
      %50 = sbr.rel (0) target = $region21
    $region20: #{tpu_custom_call.1} parent=1 // pred_region
      _
    $region21: #{tpu_custom_call.1} parent=1 // pred_fallthru
      _
    // Predicated region
    $region22: #{tpu_custom_call.1} parent=1 // pred_check
      _
    $region23: #{tpu_custom_call.1} parent=1 // pred_check_branch
      %52 = sbr.rel (0) target = $region25
    $region24: #{tpu_custom_call.1} parent=1 // pred_region
      %53 = dma.done [#allocation3], 256
    $region25: #{tpu_custom_call.1} parent=1 // pred_fallthru
      _
    // Predicated region
    $region26: #{tpu_custom_call.1} parent=1 // pred_check
      _
    $region27: #{tpu_custom_call.1} parent=1 // pred_check_branch
      %55 = sbr.rel (0) target = $region29
    $region28: #{tpu_custom_call.1} parent=1 // pred_region
      %56 = dma.done [#allocation6], 4096
    $region29: #{tpu_custom_call.1} parent=1 // pred_fallthru
      _
    // Predicated region
    $region30: #{tpu_custom_call.1} parent=1 // pred_check
      _
    $region31: #{tpu_custom_call.1} parent=1 // pred_check_branch
      %58 = sbr.rel (0) target = $region33
    $region32: #{tpu_custom_call.1} parent=1 // pred_region
      %59 = dma.done [#allocation6], 4096
    $region33: #{tpu_custom_call.1} parent=1 // pred_fallthru
      _
    %v60 = vld [vmem:[#allocation2] sm:$0xff]
    %v61 = vld [vmem:[#allocation2 + $0x8] sm:$0xff]
    %v62 = vld [vmem:[#allocation5] sm:$0xff]
    %v63 = vld [vmem:[#allocation5 + $0x8] sm:$0xff]
    %v64 = vld [vmem:[#allocation5 + $0x10] sm:$0xff]
    %v65 = vld [vmem:[#allocation5 + $0x18] sm:$0xff]
    %v66 = vld [vmem:[#allocation5 + $0x20] sm:$0xff]
    %v67 = vld [vmem:[#allocation5 + $0x28] sm:$0xff]
    %v68 = vld [vmem:[#allocation5 + $0x30] sm:$0xff]
    %v69 = vld [vmem:[#allocation5 + $0x38] sm:$0xff]
    %v70 = vld [vmem:[#allocation5 + $0x40] sm:$0xff]
    %v71 = vld [vmem:[#allocation5 + $0x48] sm:$0xff]
    %v72 = vld [vmem:[#allocation5 + $0x50] sm:$0xff]
    %v73 = vld [vmem:[#allocation5 + $0x58] sm:$0xff]
    %v74 = vld [vmem:[#allocation5 + $0x60] sm:$0xff]
    %v75 = vld [vmem:[#allocation5 + $0x68] sm:$0xff]
    %v76 = vld [vmem:[#allocation5 + $0x70] sm:$0xff]
    %v77 = vld [vmem:[#allocation5 + $0x78] sm:$0xff]
    %v78 = vld [vmem:[#allocation5 + $0x80] sm:$0xff]
    %v79 = vld [vmem:[#allocation5 + $0x88] sm:$0xff]
    %v80 = vld [vmem:[#allocation5 + $0x90] sm:$0xff]
    %v81 = vld [vmem:[#allocation5 + $0x98] sm:$0xff]
    %v82 = vld [vmem:[#allocation5 + $0xa0] sm:$0xff]
    %v83 = vld [vmem:[#allocation5 + $0xa8] sm:$0xff]
    %v84 = vld [vmem:[#allocation5 + $0xb0] sm:$0xff]
    %v85 = vld [vmem:[#allocation5 + $0xb8] sm:$0xff]
    %v86 = vld [vmem:[#allocation5 + $0xc0] sm:$0xff]
    %v87 = vld [vmem:[#allocation5 + $0xc8] sm:$0xff]
    %v88 = vld [vmem:[#allocation5 + $0xd0] sm:$0xff]
    %v89 = vld [vmem:[#allocation5 + $0xd8] sm:$0xff]
    %v90 = vld [vmem:[#allocation5 + $0xe0] sm:$0xff]
    %v91 = vld [vmem:[#allocation5 + $0xe8] sm:$0xff]
    %v92 = vld [vmem:[#allocation5 + $0xf0] sm:$0xff]
    %v93 = vld [vmem:[#allocation5 + $0xf8] sm:$0xff]
    %v94 = vld [vmem:[%s2] sm:$0x1]
    %v96 = vlaneseq
    %v97 = vshrl.u32 %v96, 7
    %v98 = vsub.s32 0, %v97
    %v99 = vrot.slane %v94, %v98
    %101 = vmatprep.subr.mxu0 0.0
    %102 = vmatpush1.msra.mxu0 %v62
    %103 = vmatprep.subr.mxu0 0.0
    %104 = vmatpush1.msra.mxu0 %v63
    %105 = vmatprep.subr.mxu0 0.0
    %106 = vmatpush1.msra.mxu0 %v64
    %107 = vmatprep.subr.mxu0 0.0
    %108 = vmatpush1.msra.mxu0 %v65
    %109 = vmatprep.subr.mxu0 0.0
    %110 = vmatpush1.msra.mxu0 %v66
    %111 = vmatprep.subr.mxu0 0.0
    %112 = vmatpush1.msra.mxu0 %v67
    %113 = vmatprep.subr.mxu0 0.0
    %114 = vmatpush1.msra.mxu0 %v68
    %115 = vmatprep.subr.mxu0 0.0
    %116 = vmatpush1.msra.mxu0 %v69
    %117 = vmatprep.subr.mxu0 0.0
    %118 = vmatpush1.msra.mxu0 %v70
    %119 = vmatprep.subr.mxu0 0.0
    %120 = vmatpush1.msra.mxu0 %v71
    %121 = vmatprep.subr.mxu0 0.0
    %122 = vmatpush1.msra.mxu0 %v72
    %123 = vmatprep.subr.mxu0 0.0
    %124 = vmatpush1.msra.mxu0 %v73
    %125 = vmatprep.subr.mxu0 0.0
    %126 = vmatpush1.msra.mxu0 %v74
    %127 = vmatprep.subr.mxu0 0.0
    %128 = vmatpush1.msra.mxu0 %v75
    %129 = vmatprep.subr.mxu0 0.0
    %130 = vmatpush1.msra.mxu0 %v76
    %131 = vmatprep.subr.mxu0 0.0
    %132 = vmatpush1.msra.mxu0 %v77
    %133 = vmatprep.subr.mxu0 0.0
    %134 = vmatpush1.msra.mxu0 %v78
    %135 = vmatprep.subr.mxu0 0.0
    %136 = vmatpush1.msra.mxu0 %v79
    %137 = vmatprep.subr.mxu0 0.0
    %138 = vmatpush1.msra.mxu0 %v80
    %139 = vmatprep.subr.mxu0 0.0
    %140 = vmatpush1.msra.mxu0 %v81
    %141 = vmatprep.subr.mxu0 0.0
    %142 = vmatpush1.msra.mxu0 %v82
    %143 = vmatprep.subr.mxu0 0.0
    %144 = vmatpush1.msra.mxu0 %v83
    %145 = vmatprep.subr.mxu0 0.0
    %146 = vmatpush1.msra.mxu0 %v84
    %147 = vmatprep.subr.mxu0 0.0
    %148 = vmatpush1.msra.mxu0 %v85
    %149 = vmatprep.subr.mxu0 0.0
    %150 = vmatpush1.msra.mxu0 %v86
    %151 = vmatprep.subr.mxu0 0.0
    %152 = vmatpush1.msra.mxu0 %v87
    %153 = vmatprep.subr.mxu0 0.0
    %154 = vmatpush1.msra.mxu0 %v88
    %155 = vmatprep.subr.mxu0 0.0
    %156 = vmatpush1.msra.mxu0 %v89
    %157 = vmatprep.subr.mxu0 0.0
    %158 = vmatpush1.msra.mxu0 %v90
    %159 = vmatprep.subr.mxu0 0.0
    %160 = vmatpush1.msra.mxu0 %v91
    %161 = vmatprep.subr.mxu0 0.0
    %162 = vmatpush1.msra.mxu0 %v92
    %163 = vmatprep.subr.mxu0 0.0
    %164 = vmatpush1.msra.mxu0 %v93
    %165 = vmatprep.mubr.f32.mxu0 %v61
    %166 = vmatmul.mubr.f32.gmra.mrb[0].mxu0 %v60
    %v167 = vpop.f32.mrb[0].mxu0
    %v168 = vadd.f32 %v99, %v167
    %v169 = vpop.f32.mrb[0].mxu0
    %170 = vdwg.mxu0
    %v171 = vmax.f32 %v168, 0.0
    %v172 = vld [vmem:[#allocation7] sm:$0xff]
    %v173 = vld [vmem:[#allocation7 + $0x8] sm:$0xff]
    %v174 = vld [vmem:[#allocation7 + $0x10] sm:$0xff]
    %v175 = vld [vmem:[#allocation7 + $0x18] sm:$0xff]
    %v176 = vld [vmem:[#allocation7 + $0x20] sm:$0xff]
    %v177 = vld [vmem:[#allocation7 + $0x28] sm:$0xff]
    %v178 = vld [vmem:[#allocation7 + $0x30] sm:$0xff]
    %v179 = vld [vmem:[#allocation7 + $0x38] sm:$0xff]
    %v180 = vld [vmem:[#allocation7 + $0x40] sm:$0xff]
    %v181 = vld [vmem:[#allocation7 + $0x48] sm:$0xff]
    %v182 = vld [vmem:[#allocation7 + $0x50] sm:$0xff]
    %v183 = vld [vmem:[#allocation7 + $0x58] sm:$0xff]
    %v184 = vld [vmem:[#allocation7 + $0x60] sm:$0xff]
    %v185 = vld [vmem:[#allocation7 + $0x68] sm:$0xff]
    %v186 = vld [vmem:[#allocation7 + $0x70] sm:$0xff]
    %v187 = vld [vmem:[#allocation7 + $0x78] sm:$0xff]
    %v188 = vld [vmem:[#allocation7 + $0x80] sm:$0xff]
    %v189 = vld [vmem:[#allocation7 + $0x88] sm:$0xff]
    %v190 = vld [vmem:[#allocation7 + $0x90] sm:$0xff]
    %v191 = vld [vmem:[#allocation7 + $0x98] sm:$0xff]
    %v192 = vld [vmem:[#allocation7 + $0xa0] sm:$0xff]
    %v193 = vld [vmem:[#allocation7 + $0xa8] sm:$0xff]
    %v194 = vld [vmem:[#allocation7 + $0xb0] sm:$0xff]
    %v195 = vld [vmem:[#allocation7 + $0xb8] sm:$0xff]
    %v196 = vld [vmem:[#allocation7 + $0xc0] sm:$0xff]
    %v197 = vld [vmem:[#allocation7 + $0xc8] sm:$0xff]
    %v198 = vld [vmem:[#allocation7 + $0xd0] sm:$0xff]
    %v199 = vld [vmem:[#allocation7 + $0xd8] sm:$0xff]
    %v200 = vld [vmem:[#allocation7 + $0xe0] sm:$0xff]
    %v201 = vld [vmem:[#allocation7 + $0xe8] sm:$0xff]
    %v202 = vld [vmem:[#allocation7 + $0xf0] sm:$0xff]
    %v203 = vld [vmem:[#allocation7 + $0xf8] sm:$0xff]
    %v204 = vld [vmem:[%s4] sm:$0x3]
    %v206 = vlaneseq
    %v207 = vshrl.u32 %v206, 7
    %v208 = vsub.s32 0, %v207
    %v209 = vrot.slane %v204, %v208
    %v210 = vlaneseq
    %v211 = vshrl.u32 %v210, 7
    %v212 = vsub.s32 1, %v211
    %v213 = vrot.slane %v204, %v212
    %216 = vmatprep.subr.mxu0 %v173
    %217 = vmatpush1.msra.mxu0 %v172
    %218 = vmatprep.subr.mxu0 %v175
    %219 = vmatpush1.msra.mxu0 %v174
    %220 = vmatprep.subr.mxu0 %v177
    %221 = vmatpush1.msra.mxu0 %v176
    %222 = vmatprep.subr.mxu0 %v179
    %223 = vmatpush1.msra.mxu0 %v178
    %224 = vmatprep.subr.mxu0 %v181
    %225 = vmatpush1.msra.mxu0 %v180
    %226 = vmatprep.subr.mxu0 %v183
    %227 = vmatpush1.msra.mxu0 %v182
    %228 = vmatprep.subr.mxu0 %v185
    %229 = vmatpush1.msra.mxu0 %v184
    %230 = vmatprep.subr.mxu0 %v187
    %231 = vmatpush1.msra.mxu0 %v186
    %232 = vmatprep.subr.mxu0 %v189
    %233 = vmatpush1.msra.mxu0 %v188
    %234 = vmatprep.subr.mxu0 %v191
    %235 = vmatpush1.msra.mxu0 %v190
    %236 = vmatprep.subr.mxu0 %v193
    %237 = vmatpush1.msra.mxu0 %v192
    %238 = vmatprep.subr.mxu0 %v195
    %239 = vmatpush1.msra.mxu0 %v194
    %240 = vmatprep.subr.mxu0 %v197
    %241 = vmatpush1.msra.mxu0 %v196
    %242 = vmatprep.subr.mxu0 %v199
    %243 = vmatpush1.msra.mxu0 %v198
    %244 = vmatprep.subr.mxu0 %v201
    %245 = vmatpush1.msra.mxu0 %v200
    %246 = vmatprep.subr.mxu0 %v203
    %247 = vmatpush1.msra.mxu0 %v202
    %248 = vmatprep.subr.mxu0 0.0
    %249 = vmatpush1.msra.mxu0 0.0
    %250 = vmatprep.subr.mxu0 0.0
    %251 = vmatpush1.msra.mxu0 0.0
    %252 = vmatprep.subr.mxu0 0.0
    %253 = vmatpush1.msra.mxu0 0.0
    %254 = vmatprep.subr.mxu0 0.0
    %255 = vmatpush1.msra.mxu0 0.0
    %256 = vmatprep.subr.mxu0 0.0
    %257 = vmatpush1.msra.mxu0 0.0
    %258 = vmatprep.subr.mxu0 0.0
    %259 = vmatpush1.msra.mxu0 0.0
    %260 = vmatprep.subr.mxu0 0.0
    %261 = vmatpush1.msra.mxu0 0.0
    %262 = vmatprep.subr.mxu0 0.0
    %263 = vmatpush1.msra.mxu0 0.0
    %264 = vmatprep.subr.mxu0 0.0
    %265 = vmatpush1.msra.mxu0 0.0
    %266 = vmatprep.subr.mxu0 0.0
    %267 = vmatpush1.msra.mxu0 0.0
    %268 = vmatprep.subr.mxu0 0.0
    %269 = vmatpush1.msra.mxu0 0.0
    %270 = vmatprep.subr.mxu0 0.0
    %271 = vmatpush1.msra.mxu0 0.0
    %272 = vmatprep.subr.mxu0 0.0
    %273 = vmatpush1.msra.mxu0 0.0
    %274 = vmatprep.subr.mxu0 0.0
    %275 = vmatpush1.msra.mxu0 0.0
    %276 = vmatprep.subr.mxu0 0.0
    %277 = vmatpush1.msra.mxu0 0.0
    %278 = vmatprep.subr.mxu0 0.0
    %279 = vmatpush1.msra.mxu0 0.0
    %280 = vmatprep.mubr.f32.mxu0 0.0
    %281 = vmatmul.mubr.f32.gmra.mrb[0].mxu0 %v171
    %v282 = vpop.f32.mrb[0].mxu0
    %v283 = vadd.f32 %v209, %v282
    %v284 = vpop.f32.mrb[0].mxu0
    %v285 = vadd.f32 %v213, %v284
    %286 = vdwg.mxu0
    %287 = vst [vmem:[#allocation8] sm:$0xff] %v283
    %288 = vst [vmem:[#allocation8 + $0x8] sm:$0xff] %v285
    // Predicated region
    $region34: #{tpu_custom_call.1} parent=1 // pred_check
      _
    $region35: #{tpu_custom_call.1} parent=1 // pred_check_branch
      %290 = sbr.rel (0) target = $region37
    $region36: #{tpu_custom_call.1} parent=1 // pred_region
      %s292 = ssub.s32 256, 256
      %293 = vsyncadd [#allocation4], %s292
      %s295 = sshll.u32 [#allocation8], 4
      %s296 = int_to_ptr.vmem [resolvable:$true] %s295
      %298 = dma.vmem_to_hbm [thread:$0]  %s296, 256, %s5, [#allocation4]
    $region37: #{tpu_custom_call.1} parent=1 // pred_fallthru
      _
    // Predicated region
    $region38: #{tpu_custom_call.1} parent=1 // pred_check
      _
    $region39: #{tpu_custom_call.1} parent=1 // pred_check_branch
      %300 = sbr.rel (0) target = $region41
    $region40: #{tpu_custom_call.1} parent=1 // pred_region
      %301 = dma.done [#allocation4], 256
    $region41: #{tpu_custom_call.1} parent=1 // pred_fallthru
      _
    %302 = vsyncpa [#allocation3], 1
    %303 = vsyncpa [#allocation6], 1
    %304 = vsyncpa [#allocation4], 1

</llo_original>
